<compile_context>
chip_gen: v7x
topology: tpu7x:2x2x1
jax: 0.10.0
libtpu: 0.0.40
codegen_flags: <defaults>
</compile_context>

<pallas_src>
import functools

import jax
import jax.numpy as jnp
from jax.experimental import pallas as pl
from jax.experimental.pallas import tpu as pltpu


# ----------------------------------------------------------------------------
# Kernel
# ----------------------------------------------------------------------------
def _ffn_kernel(x_ref, w1_ref, w2_ref, w3_ref, o_ref, acc_ref):
    """One (row-tile i, ffn-tile f) step of the SwiGLU FFN.

    x_ref  : (tm, D)      input row tile (resident across the F axis)
    w1_ref : (D, tf)      gate-projection weight tile
    w2_ref : (D, tf)      up-projection weight tile
    w3_ref : (tf, D)      down-projection weight tile
    o_ref  : (tm, D)      output row tile (resident across the F axis)
    acc_ref: (tm, D) f32  VMEM accumulator for the fc3 partial products
    """
    f = pl.program_id(1)

    @pl.when(f == 0)
    def _init():
        acc_ref[...] = jnp.zeros_like(acc_ref)

    x = x_ref[...]
    # Separate gate / up projections: two MXU matmuls, no fused-weight slab
    # and no post-matmul slice copies.
    g = jnp.dot(x, w1_ref[...], preferred_element_type=jnp.float32)  # (tm, tf)
    u = jnp.dot(x, w2_ref[...], preferred_element_type=jnp.float32)  # (tm, tf)

    # SwiGLU in f32 (sigmoid lowers to the EUP; mul on the VPU).
    h = (g * jax.nn.sigmoid(g)) * u                                   # (tm, tf)

    # Down-projection partial product, accumulated across F tiles.
    acc_ref[...] += jnp.dot(h.astype(w3_ref.dtype), w3_ref[...],
                            preferred_element_type=jnp.float32)

    @pl.when(f == pl.num_programs(1) - 1)
    def _finalize():
        o_ref[...] = acc_ref[...].astype(o_ref.dtype)


# ----------------------------------------------------------------------------
# Tiling / wrapper
# ----------------------------------------------------------------------------
def _round_up(x, m):
    return ((x + m - 1) // m) * m


def _vmem_capacity_bytes():
    """Per-core VMEM capacity; conservative 64 MiB default if query fails."""
    try:
        cap = int(getattr(pltpu.get_tpu_info(), "vmem_capacity_bytes", 0))
        if cap > 0:
            return cap
    except Exception:
        pass
    return 64 * 1024 * 1024


def _pick_tiles(M, D, F, itemsize, vmem_cap):
    """Return (tm, tf) given shapes, dtype size and per-core VMEM capacity."""
    big_vmem = vmem_cap >= 100 * 1024 * 1024      # v5e/v6e: 128 MiB physical
    sub = max(8, 32 // itemsize)                  # sublane multiple per dtype

    # Row tile: large at large M so weights are re-streamed fewer times
    # (arithmetic intensity per weight byte ~ 2*tm/itemsize).  Keep exactly 2
    # row tiles for mid-size M so v7x's two TensorCores both get work.
    big_tm = 1024 if big_vmem else 512
    if M < 256:
        tm = _round_up(max(M, 1), sub)            # decode: one tile
    elif M < 2 * big_tm:
        tm = _round_up((M + 1) // 2, sub)         # exactly 2 row tiles
    else:
        tm = big_tm

    # FFN tile: multiple of 128 dividing the (128-padded) F, with each (D, tf)
    # weight tile capped at ~2 MiB (64 MiB parts) / ~4 MiB (128 MiB parts).
    per_tile_budget = (4 if big_vmem else 2) * 1024 * 1024
    tf_cap = max(128, (per_tile_budget // (D * itemsize)) // 128 * 128)
    tf_cap = min(tf_cap, 2048)
    F128 = _round_up(max(F, 1), 128)
    tf = 128
    cand = min(tf_cap, F128)
    while cand >= 128:
        if F128 % cand == 0:
            tf = cand
            break
        cand -= 128
    return tm, tf


@functools.partial(jax.jit, static_argnames=("tm", "tf"))
def feedforward_pallas(x2d, w1, w2, w3, *, tm=None, tf=None):
    """x2d: (M, att_dim); w1, w2: (att_dim, ffn_dim); w3: (ffn_dim, att_dim)."""
    M, D = x2d.shape
    F = w1.shape[1]
    itemsize = jnp.dtype(w1.dtype).itemsize
    vmem_cap = _vmem_capacity_bytes()

    auto_tm, auto_tf = _pick_tiles(M, D, F, itemsize, vmem_cap)
    tm = auto_tm if tm is None else tm
    tf = auto_tf if tf is None else tf
    F_pad = _round_up(F, tf)

    # Pad rows (and, for awkward ffn dims, the F axis) so the grid divides
    # evenly.  Zero-padded rows / zero F columns contribute exact zeros
    # (no bias; silu(0) * 0 == 0), so results are unchanged.
    M_pad = _round_up(M, tm)
    if M_pad != M:
        x2d = jnp.pad(x2d, ((0, M_pad - M), (0, 0)))
    if F_pad != F:
        # Robustness fallback only; real model dims have F % 128 == 0 and this
        # branch is never traced (no per-call weight repacking on the hot path).
        w1 = jnp.pad(w1, ((0, 0), (0, F_pad - F)))
        w2 = jnp.pad(w2, ((0, 0), (0, F_pad - F)))
        w3 = jnp.pad(w3, ((0, F_pad - F), (0, 0)))

    grid = (M_pad // tm, F_pad // tf)
    n_row_tiles = grid[0]

    # Scoped-VMEM request: actual tile footprint (double-buffered inputs and
    # output, f32 accumulator, f32 g/u/h intermediates) with headroom, capped
    # below physical capacity so Mosaic keeps room for internal scratch.
    vmem_est = (2 * itemsize * tm * D            # x tiles (double-buffered)
                + 2 * itemsize * 3 * D * tf      # w1 / w2 / w3 tiles
                + 2 * itemsize * tm * D          # out tiles
                + 4 * tm * D                     # f32 accumulator
                + 4 * 3 * tm * tf)               # f32 g / u / h
    vmem_limit = int(min(int(0.85 * vmem_cap),
                         max(32 * 1024 * 1024, int(1.5 * vmem_est))))

    cost = pl.CostEstimate(
        flops=6 * M_pad * D * F_pad,
        transcendentals=M_pad * F_pad,
        # Weights are re-streamed once per row tile.
        bytes_accessed=(M_pad * D
                        + n_row_tiles * 3 * D * F_pad
                        + M_pad * D) * itemsize,
    )

    out = pl.pallas_call(
        _ffn_kernel,
        out_shape=jax.ShapeDtypeStruct((M_pad, D), x2d.dtype),
        grid_spec=pltpu.PrefetchScalarGridSpec(
            num_scalar_prefetch=0,
            grid=grid,
            in_specs=[
                # row tile of x, re-used across all F tiles
                pl.BlockSpec((tm, D), lambda i, f: (i, 0)),
                # W1 (gate) tile for ffn block f
                pl.BlockSpec((D, tf), lambda i, f: (0, f)),
                # W2 (up) tile for ffn block f
                pl.BlockSpec((D, tf), lambda i, f: (0, f)),
                # W3 (down) tile for ffn block f
                pl.BlockSpec((tf, D), lambda i, f: (f, 0)),
            ],
            # output resident across the F (reduction) axis -> accumulator
            out_specs=pl.BlockSpec((tm, D), lambda i, f: (i, 0)),
            scratch_shapes=[pltpu.VMEM((tm, D), jnp.float32)],
        ),
        compiler_params=pltpu.CompilerParams(
            dimension_semantics=("parallel", "arbitrary"),
            vmem_limit_bytes=vmem_limit,
        ),
        cost_estimate=cost,
    )(x2d, w1, w2, w3)

    return out[:M] if M_pad != M else out


def feedforward(x_bsd, w1, w2, w3, *, tm=None, tf=None):
    """(batch, seq, att_dim) -> (batch, seq, att_dim) wrapper."""
    B, S, D = x_bsd.shape
    out = feedforward_pallas(x_bsd.reshape(B * S, D), w1, w2, w3, tm=tm, tf=tf)
    return out.reshape(B, S, D)


def _reference(x_bsd, w1, w2, w3):
    g = x_bsd @ w1
    u = x_bsd @ w2
    return (jax.nn.silu(g) * u) @ w3


# ----------------------------------------------------------------------------
# Self-test
# ----------------------------------------------------------------------------
if __name__ == "__main__":
    key = jax.random.PRNGKey(0)

    # --- Test 1: toy shapes from the module spec, f32 -----------------------
    batch, seq, att_dim, ffn_dim = 2, 8, 32, 64
    dtype = jnp.float32
    kx, k1, k2, k3, key = jax.random.split(key, 5)
    x = jax.random.normal(kx, (batch, seq, att_dim), dtype=dtype)
    # Weights stored pre-transposed (in, out): W_here = W_torch.T
    w1 = jax.random.normal(k1, (att_dim, ffn_dim), dtype=dtype) / jnp.sqrt(att_dim).astype(dtype)
    w2 = jax.random.normal(k2, (att_dim, ffn_dim), dtype=dtype) / jnp.sqrt(att_dim).astype(dtype)
    w3 = jax.random.normal(k3, (ffn_dim, att_dim), dtype=dtype) / jnp.sqrt(ffn_dim).astype(dtype)

    out = feedforward(x, w1, w2, w3)
    jax.block_until_ready(out)
    ref = _reference(x, w1, w2, w3)
    assert out.shape == (batch, seq, att_dim)
    assert out.dtype == dtype
    assert jnp.allclose(out, ref, atol=1e-5, rtol=1e-5), "f32 toy mismatch"

    # --- Test 2: exercise F-tiling / fc3 accumulation (nf=2), f32 -----------
    B2, S2, D2, F2 = 2, 64, 128, 256
    kx, k1, k2, k3, key = jax.random.split(key, 5)
    x2 = jax.random.normal(kx, (B2, S2, D2), dtype=jnp.float32)
    w1b = jax.random.normal(k1, (D2, F2), dtype=jnp.float32) / jnp.sqrt(D2)
    w2b = jax.random.normal(k2, (D2, F2), dtype=jnp.float32) / jnp.sqrt(D2)
    w3b = jax.random.normal(k3, (F2, D2), dtype=jnp.float32) / jnp.sqrt(F2)

    out2 = feedforward(x2, w1b, w2b, w3b, tf=128)  # force 2 ffn tiles
    jax.block_until_ready(out2)
    ref2 = _reference(x2, w1b, w2b, w3b)
    assert jnp.allclose(out2, ref2, atol=1e-4, rtol=1e-4), "F-tiled mismatch"

    # --- Test 3: bf16 params/activations (f32 MXU accumulation) -------------
    out3 = feedforward(x2.astype(jnp.bfloat16), w1b.astype(jnp.bfloat16),
                       w2b.astype(jnp.bfloat16), w3b.astype(jnp.bfloat16))
    jax.block_until_ready(out3)
    assert out3.dtype == jnp.bfloat16
    assert jnp.allclose(out3.astype(jnp.float32), ref2, atol=0.1, rtol=0.1), \
        "bf16 mismatch"

    # --- Test 4: ragged M and awkward (non-128-multiple) ffn dim ------------
    B4, S4, D4, F4 = 2, 5, 128, 192      # M=10 (row padding), F pads to 256
    kx, k1, k2, k3, key = jax.random.split(key, 5)
    x4 = jax.random.normal(kx, (B4, S4, D4), dtype=jnp.float32)
    w1c = jax.random.normal(k1, (D4, F4), dtype=jnp.float32) / jnp.sqrt(D4)
    w2c = jax.random.normal(k2, (D4, F4), dtype=jnp.float32) / jnp.sqrt(D4)
    w3c = jax.random.normal(k3, (F4, D4), dtype=jnp.float32) / jnp.sqrt(F4)

    out4 = feedforward(x4, w1c, w2c, w3c)
    jax.block_until_ready(out4)
    ref4 = _reference(x4, w1c, w2c, w3c)
    assert out4.shape == (B4, S4, D4)
    assert jnp.allclose(out4, ref4, atol=1e-4, rtol=1e-4), "padded mismatch"

    print("KERNEL_OK")
</pallas_src>

<mosaic_0001>
module attributes {stable_mosaic.version = 11 : i64} {
  func.func @_ffn_kernel(%arg0: i32, %arg1: i32, %arg2: memref<16x32xf32, #tpu.memory_space<vmem>>, %arg3: memref<32x128xf32, #tpu.memory_space<vmem>>, %arg4: memref<32x128xf32, #tpu.memory_space<vmem>>, %arg5: memref<128x32xf32, #tpu.memory_space<vmem>>, %arg6: memref<16x32xf32, #tpu.memory_space<vmem>>, %arg7: memref<16x32xf32, #tpu.memory_space<vmem>>) attributes {dimension_semantics = [#tpu.dimension_semantics<parallel>, #tpu.dimension_semantics<arbitrary>], iteration_bounds = array<i64: 1, 1>, scalar_prefetch = 0 : i64, scratch_operands = 1 : i64, tpu.core_type = #tpu.core_type<tc>, window_params = [{transform_indices = @transform_0, window_bounds = array<i64: 16, 32>}, {transform_indices = @transform_1, window_bounds = array<i64: 32, 128>}, {transform_indices = @transform_2, window_bounds = array<i64: 32, 128>}, {transform_indices = @transform_3, window_bounds = array<i64: 128, 32>}, {transform_indices = @transform_4, window_bounds = array<i64: 16, 32>}]} {
    %c0_i32 = arith.constant 0 : i32
    %0 = arith.cmpi eq, %arg1, %c0_i32 : i32
    %1 = arith.extui %0 : i1 to i32
    %c0_i32_0 = arith.constant 0 : i32
    %2 = arith.cmpi ne, %1, %c0_i32_0 : i32
    scf.if %2 {
      %cst_17 = arith.constant 0.000000e+00 : f32
      %23 = vector.broadcast %cst_17 : f32 to vector<16x32xf32>
      %c0_18 = arith.constant 0 : index
      %c0_19 = arith.constant 0 : index
      %24 = vector.load %arg7[%c0_18, %c0_19] : memref<16x32xf32, #tpu.memory_space<vmem>>, vector<16x32xf32>
      tpu.vector_store %arg7[%c0_18, %c0_19], %23 {strides = array<i32>} : memref<16x32xf32, #tpu.memory_space<vmem>>, vector<16x32xf32>,
    } else {
    }
    %c0 = arith.constant 0 : index
    %c0_1 = arith.constant 0 : index
    %3 = vector.load %arg2[%c0, %c0_1] : memref<16x32xf32, #tpu.memory_space<vmem>>, vector<16x32xf32>
    %c0_2 = arith.constant 0 : index
    %c0_3 = arith.constant 0 : index
    %4 = vector.load %arg3[%c0_2, %c0_3] : memref<32x128xf32, #tpu.memory_space<vmem>>, vector<32x128xf32>
    %cst = arith.constant dense<0.000000e+00> : vector<16x128xf32>
    %5 = tpu.matmul %3, %4, %cst {dimension_numbers = #tpu.dot_dimension_numbers<[1], [0], [0], [1], [0, 0, 1, 1], [], []>} : vector<16x32xf32>, vector<32x128xf32>, vector<16x128xf32> -> vector<16x128xf32>
    %c0_4 = arith.constant 0 : index
    %c0_5 = arith.constant 0 : index
    %6 = vector.load %arg4[%c0_4, %c0_5] : memref<32x128xf32, #tpu.memory_space<vmem>>, vector<32x128xf32>
    %cst_6 = arith.constant dense<0.000000e+00> : vector<16x128xf32>
    %7 = tpu.matmul %3, %6, %cst_6 {dimension_numbers = #tpu.dot_dimension_numbers<[1], [0], [0], [1], [0, 0, 1, 1], [], []>} : vector<16x32xf32>, vector<32x128xf32>, vector<16x128xf32> -> vector<16x128xf32>
    %8 = arith.negf %5 : vector<16x128xf32>
    %9 = math.exp %8 : vector<16x128xf32>
    %cst_7 = arith.constant 1.000000e+00 : f32
    %10 = vector.broadcast %cst_7 : f32 to vector<16x128xf32>
    %11 = arith.addf %10, %9 : vector<16x128xf32>
    %12 = arith.divf %10, %11 : vector<16x128xf32>
    %13 = arith.mulf %5, %12 : vector<16x128xf32>
    %14 = arith.mulf %13, %7 : vector<16x128xf32>
    %c0_8 = arith.constant 0 : index
    %c0_9 = arith.constant 0 : index
    %15 = vector.load %arg7[%c0_8, %c0_9] : memref<16x32xf32, #tpu.memory_space<vmem>>, vector<16x32xf32>
    %c0_10 = arith.constant 0 : index
    %c0_11 = arith.constant 0 : index
    %16 = vector.load %arg5[%c0_10, %c0_11] : memref<128x32xf32, #tpu.memory_space<vmem>>, vector<128x32xf32>
    %cst_12 = arith.constant dense<0.000000e+00> : vector<16x32xf32>
    %17 = tpu.matmul %14, %16, %cst_12 {dimension_numbers = #tpu.dot_dimension_numbers<[1], [0], [0], [1], [0, 0, 1, 1], [], []>} : vector<16x128xf32>, vector<128x32xf32>, vector<16x32xf32> -> vector<16x32xf32>
    %18 = arith.addf %15, %17 : vector<16x32xf32>
    %c0_13 = arith.constant 0 : index
    %c0_14 = arith.constant 0 : index
    %19 = vector.load %arg7[%c0_13, %c0_14] : memref<16x32xf32, #tpu.memory_space<vmem>>, vector<16x32xf32>
    tpu.vector_store %arg7[%c0_13, %c0_14], %18 {strides = array<i32>} : memref<16x32xf32, #tpu.memory_space<vmem>>, vector<16x32xf32>,
    %c0_i32_15 = arith.constant 0 : i32
    %20 = arith.cmpi eq, %arg1, %c0_i32_15 : i32
    %21 = arith.extui %20 : i1 to i32
    %c0_i32_16 = arith.constant 0 : i32
    %22 = arith.cmpi ne, %21, %c0_i32_16 : i32
    scf.if %22 {
      %c0_17 = arith.constant 0 : index
      %c0_18 = arith.constant 0 : index
      %23 = vector.load %arg7[%c0_17, %c0_18] : memref<16x32xf32, #tpu.memory_space<vmem>>, vector<16x32xf32>
      %c0_19 = arith.constant 0 : index
      %c0_20 = arith.constant 0 : index
      %24 = vector.load %arg6[%c0_19, %c0_20] : memref<16x32xf32, #tpu.memory_space<vmem>>, vector<16x32xf32>
      tpu.vector_store %arg6[%c0_19, %c0_20], %23 {strides = array<i32>} : memref<16x32xf32, #tpu.memory_space<vmem>>, vector<16x32xf32>,
    } else {
    }
    return
  }
  func.func @transform_0(%arg0: i32, %arg1: i32) -> (i32, i32) {
    %c0_i32 = arith.constant 0 : i32
    %c0_i32_0 = arith.constant 0 : i32
    return %arg0, %c0_i32 : i32, i32
  }
  func.func @transform_1(%arg0: i32, %arg1: i32) -> (i32, i32) {
    %c0_i32 = arith.constant 0 : i32
    %c0_i32_0 = arith.constant 0 : i32
    return %c0_i32, %arg1 : i32, i32
  }
  func.func @transform_2(%arg0: i32, %arg1: i32) -> (i32, i32) {
    %c0_i32 = arith.constant 0 : i32
    %c0_i32_0 = arith.constant 0 : i32
    return %c0_i32, %arg1 : i32, i32
  }
  func.func @transform_3(%arg0: i32, %arg1: i32) -> (i32, i32) {
    %c0_i32 = arith.constant 0 : i32
    %c0_i32_0 = arith.constant 0 : i32
    return %arg1, %c0_i32 : i32, i32
  }
  func.func @transform_4(%arg0: i32, %arg1: i32) -> (i32, i32) {
    %c0_i32 = arith.constant 0 : i32
    %c0_i32_0 = arith.constant 0 : i32
    return %arg0, %c0_i32 : i32, i32
  }
}

</mosaic_0001>

<llo_original>
// kernel: feedforward_pallas.1
$region0: #{feedforward_pallas.1}
  #allocation0 [shape = 'u32[]', space=smem, size = 0x4, offset = 0x4, fixed_abs, tag = 'smem constant byte address 0x4 - core index']
  #allocation1 [shape = 'u32[144,128]{1,0:T(1,128)}', space=vmem, size = 0x12000, scoped, tag = 'internal scratch']
  #allocation2 [shape = 'f32[16,32]{1,0:T(8,128)}', space=vmem, size = 0x2000, scoped, tag = 'scratch operand']
  %s0 = inlined_call_operand.vmem [shape: f32[16,32], index: 0, kind: input, shape index: {}]
  %s1 = inlined_call_operand.vmem [shape: f32[32,128], index: 1, kind: input, shape index: {}]
  %s2 = inlined_call_operand.vmem [shape: f32[32,128], index: 2, kind: input, shape index: {}]
  %s3 = inlined_call_operand.vmem [shape: f32[128,32], index: 3, kind: input, shape index: {}]
  %s4 = inlined_call_operand.hbm [shape: f32[16,32], index: 4, kind: output, shape index: {}]
  %s5 = sld [smem:[#allocation0]]
  $region34: #{feedforward_pallas.1} parent=0
    _
  %s7 = ssub.s32 1, %s5
  %s8 = scalar_select 0, %s7, %s5
  $region1: #{feedforward_pallas.1} parent=0
    #allocation3 [shape = 'u8[8192]{0}', space=vmem, size = 0x2000, scoped, tag = 'output window, operand 0, single buffered']
    #allocation4 [shape = 's32[1]{0}', space=sflag, size = 0x4, scoped, tag = 'scoped memory for feedforward_pallas.1']
    %9 = vsyncpa [#allocation4], 0
    // Predicated region
    $region2: #{feedforward_pallas.1} parent=1 // pred_check
      _
    $region3: #{feedforward_pallas.1} parent=1 // pred_check_branch
      %11 = sbr.rel (0) target = $region5
    $region4: #{feedforward_pallas.1} parent=1 // pred_region
      _
    $region5: #{feedforward_pallas.1} parent=1 // pred_fallthru
      _
    // Predicated region
    $region6: #{feedforward_pallas.1} parent=1 // pred_check
      _
    $region7: #{feedforward_pallas.1} parent=1 // pred_check_branch
      %13 = sbr.rel (0) target = $region9
    $region8: #{feedforward_pallas.1} parent=1 // pred_region
      _
    $region9: #{feedforward_pallas.1} parent=1 // pred_fallthru
      _
    // Predicated region
    $region10: #{feedforward_pallas.1} parent=1 // pred_check
      _
    $region11: #{feedforward_pallas.1} parent=1 // pred_check_branch
      %15 = sbr.rel (0) target = $region13
    $region12: #{feedforward_pallas.1} parent=1 // pred_region
      _
    $region13: #{feedforward_pallas.1} parent=1 // pred_fallthru
      _
    // Predicated region
    $region14: #{feedforward_pallas.1} parent=1 // pred_check
      _
    $region15: #{feedforward_pallas.1} parent=1 // pred_check_branch
      %17 = sbr.rel (0) target = $region17
    $region16: #{feedforward_pallas.1} parent=1 // pred_region
      _
    $region17: #{feedforward_pallas.1} parent=1 // pred_fallthru
      _
    %p18 = scmp.eq.s32.totalorder 0, 0
    // Predicated region
    $region18: #{feedforward_pallas.1} parent=1 // pred_check
      %p19 = pneg %p18
    $region19: #{feedforward_pallas.1} parent=1 // pred_check_branch
      %21 = sbr.rel (%p19) target = $region21
    $region20: #{feedforward_pallas.1} parent=1 // pred_region
      %vm22 = vcmask 261120
      %23 = vst.msk [vmem:[#allocation2] sm:$0xff] %vm22, 0.0
      %24 = vst.msk [vmem:[#allocation2 + $0x8] sm:$0xff] %vm22, 0.0
    $region21: #{feedforward_pallas.1} parent=1 // pred_fallthru
      _
    %v25 = vld [vmem:[%s0] sm:$0xff]
    %v26 = vld [vmem:[%s0 + $0x8] sm:$0xff]
    %v27 = vld [vmem:[%s1] sm:$0xff]
    %v28 = vld [vmem:[%s1 + $0x8] sm:$0xff]
    %v29 = vld [vmem:[%s1 + $0x10] sm:$0xff]
    %v30 = vld [vmem:[%s1 + $0x18] sm:$0xff]
    %vm31 = vcmask 261120
    %v33 = vsel %vm31, %v25, 0
    %v36 = vsel %vm31, %v26, 0
    %38 = vmatprep.subr.mxu0 0.0
    %39 = vmatpush1.msra.mxu0 %v27
    %40 = vmatprep.subr.mxu0 0.0
    %41 = vmatpush1.msra.mxu0 %v28
    %42 = vmatprep.subr.mxu0 0.0
    %43 = vmatpush1.msra.mxu0 %v29
    %44 = vmatprep.subr.mxu0 0.0
    %45 = vmatpush1.msra.mxu0 %v30
    %46 = vmatprep.subr.mxu0 0.0
    %47 = vmatpush1.msra.mxu0 0.0
    %48 = vmatprep.subr.mxu0 0.0
    %49 = vmatpush1.msra.mxu0 0.0
    %50 = vmatprep.subr.mxu0 0.0
    %51 = vmatpush1.msra.mxu0 0.0
    %52 = vmatprep.subr.mxu0 0.0
    %53 = vmatpush1.msra.mxu0 0.0
    %54 = vmatprep.subr.mxu0 0.0
    %55 = vmatpush1.msra.mxu0 0.0
    %56 = vmatprep.subr.mxu0 0.0
    %57 = vmatpush1.msra.mxu0 0.0
    %58 = vmatprep.subr.mxu0 0.0
    %59 = vmatpush1.msra.mxu0 0.0
    %60 = vmatprep.subr.mxu0 0.0
    %61 = vmatpush1.msra.mxu0 0.0
    %62 = vmatprep.subr.mxu0 0.0
    %63 = vmatpush1.msra.mxu0 0.0
    %64 = vmatprep.subr.mxu0 0.0
    %65 = vmatpush1.msra.mxu0 0.0
    %66 = vmatprep.subr.mxu0 0.0
    %67 = vmatpush1.msra.mxu0 0.0
    %68 = vmatprep.subr.mxu0 0.0
    %69 = vmatpush1.msra.mxu0 0.0
    %70 = vmatprep.subr.mxu0 0.0
    %71 = vmatpush1.msra.mxu0 0.0
    %72 = vmatprep.subr.mxu0 0.0
    %73 = vmatpush1.msra.mxu0 0.0
    %74 = vmatprep.subr.mxu0 0.0
    %75 = vmatpush1.msra.mxu0 0.0
    %76 = vmatprep.subr.mxu0 0.0
    %77 = vmatpush1.msra.mxu0 0.0
    %78 = vmatprep.subr.mxu0 0.0
    %79 = vmatpush1.msra.mxu0 0.0
    %80 = vmatprep.subr.mxu0 0.0
    %81 = vmatpush1.msra.mxu0 0.0
    %82 = vmatprep.subr.mxu0 0.0
    %83 = vmatpush1.msra.mxu0 0.0
    %84 = vmatprep.subr.mxu0 0.0
    %85 = vmatpush1.msra.mxu0 0.0
    %86 = vmatprep.subr.mxu0 0.0
    %87 = vmatpush1.msra.mxu0 0.0
    %88 = vmatprep.subr.mxu0 0.0
    %89 = vmatpush1.msra.mxu0 0.0
    %90 = vmatprep.subr.mxu0 0.0
    %91 = vmatpush1.msra.mxu0 0.0
    %92 = vmatprep.subr.mxu0 0.0
    %93 = vmatpush1.msra.mxu0 0.0
    %94 = vmatprep.subr.mxu0 0.0
    %95 = vmatpush1.msra.mxu0 0.0
    %96 = vmatprep.subr.mxu0 0.0
    %97 = vmatpush1.msra.mxu0 0.0
    %98 = vmatprep.subr.mxu0 0.0
    %99 = vmatpush1.msra.mxu0 0.0
    %100 = vmatprep.subr.mxu0 0.0
    %101 = vmatpush1.msra.mxu0 0.0
    %102 = vmatprep.mubr.f32.mxu0 0.0
    %103 = vmatmul.mubr.f32.gmra.mrb[0].mxu0 %v33
    %v104 = vpop.f32.mrb[0].mxu0
    %v105 = vadd.f32 0.0, %v104
    %v106 = vpop.f32.mrb[0].mxu0
    %107 = vmatprep.mubr.f32.mxu0 0.0
    %108 = vmatmul.mubr.f32.gmra.mrb[0].mxu0 %v36
    %v109 = vpop.f32.mrb[0].mxu0
    %v110 = vadd.f32 0.0, %v109
    %v111 = vpop.f32.mrb[0].mxu0
    %112 = vdwg.mxu0
    %v113 = vld [vmem:[%s2] sm:$0xff]
    %v114 = vld [vmem:[%s2 + $0x8] sm:$0xff]
    %v115 = vld [vmem:[%s2 + $0x10] sm:$0xff]
    %v116 = vld [vmem:[%s2 + $0x18] sm:$0xff]
    %117 = vmatprep.subr.mxu0 0.0
    %118 = vmatpush1.msra.mxu0 %v113
    %119 = vmatprep.subr.mxu0 0.0
    %120 = vmatpush1.msra.mxu0 %v114
    %121 = vmatprep.subr.mxu0 0.0
    %122 = vmatpush1.msra.mxu0 %v115
    %123 = vmatprep.subr.mxu0 0.0
    %124 = vmatpush1.msra.mxu0 %v116
    %125 = vmatprep.subr.mxu0 0.0
    %126 = vmatpush1.msra.mxu0 0.0
    %127 = vmatprep.subr.mxu0 0.0
    %128 = vmatpush1.msra.mxu0 0.0
    %129 = vmatprep.subr.mxu0 0.0
    %130 = vmatpush1.msra.mxu0 0.0
    %131 = vmatprep.subr.mxu0 0.0
    %132 = vmatpush1.msra.mxu0 0.0
    %133 = vmatprep.subr.mxu0 0.0
    %134 = vmatpush1.msra.mxu0 0.0
    %135 = vmatprep.subr.mxu0 0.0
    %136 = vmatpush1.msra.mxu0 0.0
    %137 = vmatprep.subr.mxu0 0.0
    %138 = vmatpush1.msra.mxu0 0.0
    %139 = vmatprep.subr.mxu0 0.0
    %140 = vmatpush1.msra.mxu0 0.0
    %141 = vmatprep.subr.mxu0 0.0
    %142 = vmatpush1.msra.mxu0 0.0
    %143 = vmatprep.subr.mxu0 0.0
    %144 = vmatpush1.msra.mxu0 0.0
    %145 = vmatprep.subr.mxu0 0.0
    %146 = vmatpush1.msra.mxu0 0.0
    %147 = vmatprep.subr.mxu0 0.0
    %148 = vmatpush1.msra.mxu0 0.0
    %149 = vmatprep.subr.mxu0 0.0
    %150 = vmatpush1.msra.mxu0 0.0
    %151 = vmatprep.subr.mxu0 0.0
    %152 = vmatpush1.msra.mxu0 0.0
    %153 = vmatprep.subr.mxu0 0.0
    %154 = vmatpush1.msra.mxu0 0.0
    %155 = vmatprep.subr.mxu0 0.0
    %156 = vmatpush1.msra.mxu0 0.0
    %157 = vmatprep.subr.mxu0 0.0
    %158 = vmatpush1.msra.mxu0 0.0
    %159 = vmatprep.subr.mxu0 0.0
    %160 = vmatpush1.msra.mxu0 0.0
    %161 = vmatprep.subr.mxu0 0.0
    %162 = vmatpush1.msra.mxu0 0.0
    %163 = vmatprep.subr.mxu0 0.0
    %164 = vmatpush1.msra.mxu0 0.0
    %165 = vmatprep.subr.mxu0 0.0
    %166 = vmatpush1.msra.mxu0 0.0
    %167 = vmatprep.subr.mxu0 0.0
    %168 = vmatpush1.msra.mxu0 0.0
    %169 = vmatprep.subr.mxu0 0.0
    %170 = vmatpush1.msra.mxu0 0.0
    %171 = vmatprep.subr.mxu0 0.0
    %172 = vmatpush1.msra.mxu0 0.0
    %173 = vmatprep.subr.mxu0 0.0
    %174 = vmatpush1.msra.mxu0 0.0
    %175 = vmatprep.subr.mxu0 0.0
    %176 = vmatpush1.msra.mxu0 0.0
    %177 = vmatprep.subr.mxu0 0.0
    %178 = vmatpush1.msra.mxu0 0.0
    %179 = vmatprep.subr.mxu0 0.0
    %180 = vmatpush1.msra.mxu0 0.0
    %181 = vmatprep.mubr.f32.mxu0 0.0
    %182 = vmatmul.mubr.f32.gmra.mrb[0].mxu0 %v33
    %v183 = vpop.f32.mrb[0].mxu0
    %v184 = vadd.f32 0.0, %v183
    %v185 = vpop.f32.mrb[0].mxu0
    %186 = vmatprep.mubr.f32.mxu0 0.0
    %187 = vmatmul.mubr.f32.gmra.mrb[0].mxu0 %v36
    %v188 = vpop.f32.mrb[0].mxu0
    %v189 = vadd.f32 0.0, %v188
    %v190 = vpop.f32.mrb[0].mxu0
    %191 = vdwg.mxu0
    %v192 = vxor.u32 %v105, 2147483648
    %v193 = vxor.u32 %v110, 2147483648
    %v194 = vmul.f32 %v192, 1.442695
    %v195 = vpow.pop %v194
    %v196 = vmul.f32 %v193, 1.442695
    %v197 = vpow.pop %v196
    %v198 = vadd.f32 %v195, 1.0
    %v199 = vadd.f32 %v197, 1.0
    %v200 = vrcp.pop %v198
    %v201 = vmul.f32 1.0, %v200
    %v202 = vrcp.pop %v199
    %v203 = vmul.f32 1.0, %v202
    %v204 = vmul.f32 %v105, %v201
    %v205 = vmul.f32 %v110, %v203
    %v206 = vmul.f32 %v204, %v184
    %v207 = vmul.f32 %v205, %v189
    %v208 = vld [vmem:[#allocation2] sm:$0xff]
    %v209 = vld [vmem:[#allocation2 + $0x8] sm:$0xff]
    %v210 = vld [vmem:[%s3] sm:$0xff]
    %v211 = vld [vmem:[%s3 + $0x8] sm:$0xff]
    %v212 = vld [vmem:[%s3 + $0x10] sm:$0xff]
    %v213 = vld [vmem:[%s3 + $0x18] sm:$0xff]
    %v214 = vld [vmem:[%s3 + $0x20] sm:$0xff]
    %v215 = vld [vmem:[%s3 + $0x28] sm:$0xff]
    %v216 = vld [vmem:[%s3 + $0x30] sm:$0xff]
    %v217 = vld [vmem:[%s3 + $0x38] sm:$0xff]
    %v218 = vld [vmem:[%s3 + $0x40] sm:$0xff]
    %v219 = vld [vmem:[%s3 + $0x48] sm:$0xff]
    %v220 = vld [vmem:[%s3 + $0x50] sm:$0xff]
    %v221 = vld [vmem:[%s3 + $0x58] sm:$0xff]
    %v222 = vld [vmem:[%s3 + $0x60] sm:$0xff]
    %v223 = vld [vmem:[%s3 + $0x68] sm:$0xff]
    %v224 = vld [vmem:[%s3 + $0x70] sm:$0xff]
    %v225 = vld [vmem:[%s3 + $0x78] sm:$0xff]
    %226 = vmatprep.subr.mxu0 0.0
    %227 = vmatpush1.msra.mxu0 %v210
    %228 = vmatprep.subr.mxu0 0.0
    %229 = vmatpush1.msra.mxu0 %v211
    %230 = vmatprep.subr.mxu0 0.0
    %231 = vmatpush1.msra.mxu0 %v212
    %232 = vmatprep.subr.mxu0 0.0
    %233 = vmatpush1.msra.mxu0 %v213
    %234 = vmatprep.subr.mxu0 0.0
    %235 = vmatpush1.msra.mxu0 %v214
    %236 = vmatprep.subr.mxu0 0.0
    %237 = vmatpush1.msra.mxu0 %v215
    %238 = vmatprep.subr.mxu0 0.0
    %239 = vmatpush1.msra.mxu0 %v216
    %240 = vmatprep.subr.mxu0 0.0
    %241 = vmatpush1.msra.mxu0 %v217
    %242 = vmatprep.subr.mxu0 0.0
    %243 = vmatpush1.msra.mxu0 %v218
    %244 = vmatprep.subr.mxu0 0.0
    %245 = vmatpush1.msra.mxu0 %v219
    %246 = vmatprep.subr.mxu0 0.0
    %247 = vmatpush1.msra.mxu0 %v220
    %248 = vmatprep.subr.mxu0 0.0
    %249 = vmatpush1.msra.mxu0 %v221
    %250 = vmatprep.subr.mxu0 0.0
    %251 = vmatpush1.msra.mxu0 %v222
    %252 = vmatprep.subr.mxu0 0.0
    %253 = vmatpush1.msra.mxu0 %v223
    %254 = vmatprep.subr.mxu0 0.0
    %255 = vmatpush1.msra.mxu0 %v224
    %256 = vmatprep.subr.mxu0 0.0
    %257 = vmatpush1.msra.mxu0 %v225
    %258 = vmatprep.subr.mxu0 0.0
    %259 = vmatpush1.msra.mxu0 0.0
    %260 = vmatprep.subr.mxu0 0.0
    %261 = vmatpush1.msra.mxu0 0.0
    %262 = vmatprep.subr.mxu0 0.0
    %263 = vmatpush1.msra.mxu0 0.0
    %264 = vmatprep.subr.mxu0 0.0
    %265 = vmatpush1.msra.mxu0 0.0
    %266 = vmatprep.subr.mxu0 0.0
    %267 = vmatpush1.msra.mxu0 0.0
    %268 = vmatprep.subr.mxu0 0.0
    %269 = vmatpush1.msra.mxu0 0.0
    %270 = vmatprep.subr.mxu0 0.0
    %271 = vmatpush1.msra.mxu0 0.0
    %272 = vmatprep.subr.mxu0 0.0
    %273 = vmatpush1.msra.mxu0 0.0
    %274 = vmatprep.subr.mxu0 0.0
    %275 = vmatpush1.msra.mxu0 0.0
    %276 = vmatprep.subr.mxu0 0.0
    %277 = vmatpush1.msra.mxu0 0.0
    %278 = vmatprep.subr.mxu0 0.0
    %279 = vmatpush1.msra.mxu0 0.0
    %280 = vmatprep.subr.mxu0 0.0
    %281 = vmatpush1.msra.mxu0 0.0
    %282 = vmatprep.subr.mxu0 0.0
    %283 = vmatpush1.msra.mxu0 0.0
    %284 = vmatprep.subr.mxu0 0.0
    %285 = vmatpush1.msra.mxu0 0.0
    %286 = vmatprep.subr.mxu0 0.0
    %287 = vmatpush1.msra.mxu0 0.0
    %288 = vmatprep.subr.mxu0 0.0
    %289 = vmatpush1.msra.mxu0 0.0
    %290 = vmatprep.mubr.f32.mxu0 0.0
    %291 = vmatmul.mubr.f32.gmra.mrb[0].mxu0 %v206
    %v292 = vpop.f32.mrb[0].mxu0
    %v293 = vadd.f32 0.0, %v292
    %v294 = vpop.f32.mrb[0].mxu0
    %295 = vmatprep.mubr.f32.mxu0 0.0
    %296 = vmatmul.mubr.f32.gmra.mrb[0].mxu0 %v207
    %v297 = vpop.f32.mrb[0].mxu0
    %v298 = vadd.f32 0.0, %v297
    %v299 = vpop.f32.mrb[0].mxu0
    %300 = vdwg.mxu0
    %v301 = vadd.f32 %v208, %v293
    %v302 = vadd.f32 %v209, %v298
    %303 = vst.msk [vmem:[#allocation2] sm:$0xff] %vm31, %v301
    %304 = vst.msk [vmem:[#allocation2 + $0x8] sm:$0xff] %vm31, %v302
    // Predicated region
    $region22: #{feedforward_pallas.1} parent=1 // pred_check
      %p305 = pneg %p18
    $region23: #{feedforward_pallas.1} parent=1 // pred_check_branch
      %307 = sbr.rel (%p305) target = $region25
    $region24: #{feedforward_pallas.1} parent=1 // pred_region
      %v308 = vld [vmem:[#allocation2] sm:$0xff]
      %v309 = vld [vmem:[#allocation2 + $0x8] sm:$0xff]
      %310 = vst.msk [vmem:[#allocation3] sm:$0xff] %vm31, %v308
      %311 = vst.msk [vmem:[#allocation3 + $0x8] sm:$0xff] %vm31, %v309
    $region25: #{feedforward_pallas.1} parent=1 // pred_fallthru
      _
    // Predicated region
    $region26: #{feedforward_pallas.1} parent=1 // pred_check
      _
    $region27: #{feedforward_pallas.1} parent=1 // pred_check_branch
      %313 = sbr.rel (0) target = $region29
    $region28: #{feedforward_pallas.1} parent=1 // pred_region
      %s315 = ssub.s32 256, 256
      %316 = vsyncadd [#allocation4], %s315
      %s317 = sshll.u32 [#allocation3], 4
      %s318 = int_to_ptr.vmem [resolvable:$true] %s317
      %323 = dma.vmem_to_hbm [thread:$0]  %s318, 256, %s4, [#allocation4], 128, 128, 8
    $region29: #{feedforward_pallas.1} parent=1 // pred_fallthru
      _
    // Predicated region
    $region30: #{feedforward_pallas.1} parent=1 // pred_check
      _
    $region31: #{feedforward_pallas.1} parent=1 // pred_check_branch
      %325 = sbr.rel (0) target = $region33
    $region32: #{feedforward_pallas.1} parent=1 // pred_region
      %326 = dma.done [#allocation4], 256
    $region33: #{feedforward_pallas.1} parent=1 // pred_fallthru
      _
    %327 = vsyncpa [#allocation4], 1

</llo_original>
